<compile_context>
chip_gen: v5e
topology: v5e:2x2
jax: 0.10.0
libtpu: 0.0.40
codegen_flags: <defaults>
</compile_context>

<pallas_src>
import functools

import jax
import jax.numpy as jnp
from jax.experimental import pallas as pl
from jax.experimental.pallas import tpu as pltpu


def _round_up(x, m):
    return (x + m - 1) // m * m


def _vmem_limit_bytes():
    """Generation-dependent scoped VMEM limit (~3/4 of physical capacity)."""
    cap = 64 * 1024 * 1024
    try:
        info = pltpu.get_tpu_info()
        cap = int(getattr(info, "vmem_capacity_bytes", cap)) or cap
    except Exception:
        pass
    # ~96 MiB on v5e/v6e (128 MiB physical), ~48 MiB on v7x (64 MiB physical).
    return int(max(32 * 1024 * 1024, min(cap * 3 // 4, 112 * 1024 * 1024)))


# ---------------------------------------------------------------------------
# Kernel 1 (used twice): plain tiled matmul, grid over row tiles ("parallel").
#   a) node projections:  [proj | skip | s_src | s_trg | 0-pad] = x  @ W_all
#   b) review scores:                                    s_rev = rev @ W_rev
# bf16 operands, f32 accumulation on the MXU.
# ---------------------------------------------------------------------------
def _matmul_kernel(x_ref, w_ref, o_ref):
    o_ref[...] = jnp.dot(x_ref[...], w_ref[...],
                         preferred_element_type=jnp.float32)


# ---------------------------------------------------------------------------
# Kernel 2: single streaming edge pass (grid over edge tiles, "arbitrary").
# Per tile:
#   * build (te, N) gather one-hots and (N, te) scatter one-hot from the edge
#     index tile (iota compare, VPU) -- all subsequent gathers/scatters are MXU
#     matmuls, no serial loops, no masked row-wise RMW stores.
#   * p = exp(leaky(s_src[src] + s_trg[trg] + s_rev) - shift), padded edges
#     masked to 0.
#   * denom  += onehot_trg @ p                 (per-target softmax denominator)
#   * out    += onehot_trg @ (p * (proj[src] + s_rev))   (unnormalized agg)
# Last step: out = out * (1 / (denom + 1e-16)) broadcast per head + skip.
# ---------------------------------------------------------------------------
def _edge_pass_kernel(srev_ref, ssrc_ref, strg_ref, proj_ref, skip_ref,
                      src_col_ref, trg_col_ref, trg_row_ref, shift_ref,
                      out_ref, denom_ref,
                      *, edge_tile, num_edges, num_heads, fout):
    step = pl.program_id(0)
    te = edge_tile
    nh = num_heads
    n_pad = proj_ref.shape[0]

    @pl.when(step == 0)
    def _init():
        out_ref[...] = jnp.zeros_like(out_ref)
        denom_ref[...] = jnp.zeros_like(denom_ref)

    base = pl.multiple_of(step * te, te)

    # Edge-index tile in both orientations (no in-kernel transposes needed).
    src_c = src_col_ref[pl.ds(base, te), :]                    # (te, 1) int32
    trg_c = trg_col_ref[pl.ds(base, te), :]                    # (te, 1) int32
    trg_r = trg_row_ref[pl.ds(step, 1), :]                     # (1, te) int32

    gather_iota = jax.lax.broadcasted_iota(jnp.int32, (te, n_pad), 1)
    g_src = (gather_iota == src_c).astype(jnp.float32)         # (te, n_pad)
    g_trg = (gather_iota == trg_c).astype(jnp.float32)         # (te, n_pad)
    scat_iota = jax.lax.broadcasted_iota(jnp.int32, (n_pad, te), 0)
    s_trg = (scat_iota == trg_r).astype(jnp.float32)           # (n_pad, te)

    # Vectorized gathers: exact one-hot matmuls on the MXU (f32).
    ssrc_l = jnp.dot(g_src, ssrc_ref[...], preferred_element_type=jnp.float32)
    strg_l = jnp.dot(g_trg, strg_ref[...], preferred_element_type=jnp.float32)
    plift = jnp.dot(g_src, proj_ref[...], preferred_element_type=jnp.float32)

    srev = srev_ref[...]                                        # (te, nh)
    scores = ssrc_l + strg_l + srev
    scores = jnp.where(scores > 0.0, scores, 0.2 * scores)      # LeakyReLU(0.2)
    # shift is a global upper bound of the scores -> exp argument <= 0.
    p = jnp.exp(scores - shift_ref[0])                          # (te, nh)
    eid = base + jax.lax.broadcasted_iota(jnp.int32, (te, 1), 0)
    p = jnp.where(eid < num_edges, p, 0.0)                      # mask padded edges

    # Unnormalized weighted messages, head-major packing (col = h*FOUT + f).
    parts = []
    for h in range(nh):
        parts.append((plift[:, h * fout:(h + 1) * fout] + srev[:, h:h + 1])
                     * p[:, h:h + 1])
    msg = parts[0] if nh == 1 else jnp.concatenate(parts, axis=1)  # (te, nh*fout)

    # MXU scatter-adds into the resident accumulators.
    denom_ref[...] += jnp.dot(s_trg, p, preferred_element_type=jnp.float32)
    out_ref[...] += jnp.dot(s_trg, msg, preferred_element_type=jnp.float32)

    @pl.when(step == pl.num_programs(0) - 1)
    def _finalize():
        # One reciprocal per node (not per edge), then per-head normalization
        # and skip connection, all on the resident output block.
        dinv = pl.reciprocal(denom_ref[...] + 1e-16, approx=False)  # (n_pad, nh)
        acc = out_ref[...]
        outs = []
        for h in range(nh):
            outs.append(acc[:, h * fout:(h + 1) * fout] * dinv[:, h:h + 1])
        normed = outs[0] if nh == 1 else jnp.concatenate(outs, axis=1)
        out_ref[...] = normed + skip_ref[...]


# ---------------------------------------------------------------------------
# Per-layer wrapper
# ---------------------------------------------------------------------------
def gat_layer_apply(x, rev, edge_index, p, *, node_tile=256, edge_tile=512):
    """One GATLayer forward (inference). x:(N,FIN) rev:(E,FIN) edge_index:(2,E)."""
    assert node_tile % 8 == 0 and edge_tile % 8 == 0
    N, fin = x.shape
    E = edge_index.shape[1]
    nh, fout = p["num_heads"], p["num_out"]
    nhf = nh * fout
    assert rev.shape[1] == fin

    vmem_limit = _vmem_limit_bytes()

    # ---- host-side weight prep: fold scoring vectors, pack heads (head-major) ----
    w3 = p["w"].reshape(fin, nh, fout)                    # (FIN, NH, FOUT)
    w_packed = w3.reshape(fin, nhf)                       # column c = h*FOUT + f
    if fout == fin:
        # identity skip: out[:, h, :] += x   (tiled identity, packed head-major)
        sk3 = jnp.tile(jnp.eye(fin, dtype=jnp.float32)[:, None, :], (1, nh, 1))
    else:
        sk3 = p["w_skip"].reshape(fin, nh, fout)
    skip_packed = sk3.reshape(fin, nhf)
    w_src = (w3 * p["a_src"][None]).sum(-1)               # (FIN, NH) folded scorer
    w_trg = (w3 * p["a_trg"][None]).sum(-1)
    w_rev = (w3 * p["a_rev"][None]).sum(-1)

    d_all = 2 * nhf + 2 * nh
    d_pad = _round_up(d_all, 128)                         # lane-dense kernel-1 output
    w_all = jnp.zeros((fin, d_pad), jnp.float32)
    w_all = w_all.at[:, :nhf].set(w_packed)
    w_all = w_all.at[:, nhf:2 * nhf].set(skip_packed)
    w_all = w_all.at[:, 2 * nhf:2 * nhf + nh].set(w_src)
    w_all = w_all.at[:, 2 * nhf + nh:2 * nhf + 2 * nh].set(w_trg)
    w_all = w_all.astype(jnp.bfloat16)

    # ---- padding / tiling ----
    tn = min(node_tile, _round_up(N, 8))
    te = min(edge_tile, _round_up(E, 8))
    n_pad = _round_up(N, tn)
    e_pad = _round_up(E, te)
    n_e_tiles = e_pad // te

    xp = jnp.zeros((n_pad, fin), jnp.bfloat16).at[:N].set(x.astype(jnp.bfloat16))
    revp = jnp.zeros((e_pad, fin), jnp.bfloat16).at[:E].set(rev.astype(jnp.bfloat16))
    src_pad = jnp.zeros((e_pad,), jnp.int32).at[:E].set(edge_index[0].astype(jnp.int32))
    trg_pad = jnp.zeros((e_pad,), jnp.int32).at[:E].set(edge_index[1].astype(jnp.int32))
    src_col = src_pad.reshape(e_pad, 1)
    trg_col = trg_pad.reshape(e_pad, 1)
    trg_row = trg_pad.reshape(n_e_tiles, te)

    # ---- kernel 1a: fused node projections (parallel over node tiles) ----
    node_all = pl.pallas_call(
        _matmul_kernel,
        out_shape=jax.ShapeDtypeStruct((n_pad, d_pad), jnp.float32),
        grid_spec=pltpu.PrefetchScalarGridSpec(
            num_scalar_prefetch=0,
            grid=(n_pad // tn,),
            in_specs=[pl.BlockSpec((tn, fin), lambda i: (i, 0)),
                      pl.BlockSpec((fin, d_pad), lambda i: (0, 0))],
            out_specs=pl.BlockSpec((tn, d_pad), lambda i: (i, 0)),
        ),
        compiler_params=pltpu.CompilerParams(
            dimension_semantics=("parallel",),
            vmem_limit_bytes=vmem_limit),
    )(xp, w_all)

    proj = node_all[:, :nhf]                       # packed projected node features
    skip = node_all[:, nhf:2 * nhf]                # packed skip projection
    s_src = node_all[:, 2 * nhf:2 * nhf + nh]      # per-node source scores
    s_trg = node_all[:, 2 * nhf + nh:2 * nhf + 2 * nh]   # per-node target scores

    # ---- kernel 1b: per-edge review scores (parallel over edge tiles) ----
    srev = pl.pallas_call(
        _matmul_kernel,
        out_shape=jax.ShapeDtypeStruct((e_pad, nh), jnp.float32),
        grid_spec=pltpu.PrefetchScalarGridSpec(
            num_scalar_prefetch=0,
            grid=(n_e_tiles,),
            in_specs=[pl.BlockSpec((te, fin), lambda i: (i, 0)),
                      pl.BlockSpec((fin, nh), lambda i: (0, 0))],
            out_specs=pl.BlockSpec((te, nh), lambda i: (i, 0)),
        ),
        compiler_params=pltpu.CompilerParams(
            dimension_semantics=("parallel",),
            vmem_limit_bytes=vmem_limit),
    )(revp, w_rev.astype(jnp.bfloat16))

    # Global upper bound on the post-LeakyReLU scores (constant shift cancels
    # in the softmax; it only prevents exp() overflow, like torch's global max).
    raw_max = (jnp.max(s_src[:N]) + jnp.max(s_trg[:N]) + jnp.max(srev[:E]))
    shift = jnp.where(raw_max > 0.0, raw_max, 0.2 * raw_max)
    shift = jnp.reshape(shift, (1,)).astype(jnp.float32)

    # ---- kernel 2: fused edge pass (softmax denominators + aggregation) ----
    k2 = functools.partial(_edge_pass_kernel, edge_tile=te, num_edges=E,
                           num_heads=nh, fout=fout)
    out_packed = pl.pallas_call(
        k2,
        out_shape=jax.ShapeDtypeStruct((n_pad, nhf), jnp.float32),
        grid_spec=pltpu.PrefetchScalarGridSpec(
            num_scalar_prefetch=0,
            grid=(n_e_tiles,),
            in_specs=[
                pl.BlockSpec((te, nh), lambda i: (i, 0)),            # s_rev tile
                pl.BlockSpec((n_pad, nh), lambda i: (0, 0)),         # s_src (resident)
                pl.BlockSpec((n_pad, nh), lambda i: (0, 0)),         # s_trg (resident)
                pl.BlockSpec((n_pad, nhf), lambda i: (0, 0)),        # proj  (resident)
                pl.BlockSpec((n_pad, nhf), lambda i: (0, 0)),        # skip  (resident)
                pl.BlockSpec((e_pad, 1), lambda i: (0, 0)),          # src idx (col)
                pl.BlockSpec((e_pad, 1), lambda i: (0, 0)),          # trg idx (col)
                pl.BlockSpec((n_e_tiles, te), lambda i: (0, 0)),     # trg idx (row)
                pl.BlockSpec(memory_space=pltpu.MemorySpace.SMEM),   # shift scalar
            ],
            out_specs=pl.BlockSpec((n_pad, nhf), lambda i: (0, 0)),  # resident accumulator
            scratch_shapes=[pltpu.VMEM((n_pad, nh), jnp.float32)],   # softmax denom
        ),
        compiler_params=pltpu.CompilerParams(
            dimension_semantics=("arbitrary",),
            vmem_limit_bytes=vmem_limit),
    )(srev, s_src, s_trg, proj, skip, src_col, trg_col, trg_row, shift)

    # ---- tiny wrapper-side epilogue (head handling / bias / activation) ----
    out = out_packed[:N]                                   # head-major (N, NH*FOUT)
    if p["concat"]:
        out_nodes = out                                    # matches torch view(-1, NH*FOUT)
    else:
        out_nodes = out.reshape(N, nh, fout).mean(axis=1)  # mean over heads
    out_nodes = out_nodes + p["bias"][None, :]
    if p["apply_elu"]:
        out_nodes = jnp.where(out_nodes > 0, out_nodes, jnp.expm1(out_nodes))  # ELU
    return out_nodes


def gat_forward(params, data, *, node_tile=256, edge_tile=512):
    x, rev, edge_index = data
    for p in params:
        x = gat_layer_apply(x, rev, edge_index, p,
                            node_tile=node_tile, edge_tile=edge_tile)
    return x, rev, edge_index


def init_gat_params(key, num_of_layers, num_heads_per_layer, num_features_per_layer):
    assert num_of_layers == len(num_heads_per_layer) == len(num_features_per_layer) - 1
    heads = [1] + list(num_heads_per_layer)
    params = []
    for i in range(num_of_layers):
        fin = num_features_per_layer[i] * heads[i]
        fout = num_features_per_layer[i + 1]
        nh = heads[i + 1]
        concat = i < num_of_layers - 1
        key, kw, ks, ka, kb, kc = jax.random.split(key, 6)
        lim_w = (6.0 / (fin + nh * fout)) ** 0.5                 # xavier-uniform
        lim_a = (6.0 / (nh + fout)) ** 0.5
        params.append(dict(
            num_heads=nh, num_out=fout, concat=concat, apply_elu=concat,
            w=jax.random.uniform(kw, (fin, nh * fout), jnp.float32, -lim_w, lim_w),
            w_skip=jax.random.uniform(ks, (fin, nh * fout), jnp.float32, -lim_w, lim_w),
            a_src=jax.random.uniform(ka, (nh, fout), jnp.float32, -lim_a, lim_a),
            a_trg=jax.random.uniform(kb, (nh, fout), jnp.float32, -lim_a, lim_a),
            a_rev=jax.random.uniform(kc, (nh, fout), jnp.float32, -lim_a, lim_a),
            bias=jnp.zeros((nh * fout if concat else fout,), jnp.float32),
        ))
    return params


if __name__ == "__main__":
    # GAT(num_of_layers=2, num_heads_per_layer=[4, 1], num_features_per_layer=[32, 8, 8])
    # layer0: FIN=32 -> 4 heads x 8 (concat, ELU);  layer1: FIN=32 -> 1 head x 8 (mean)
    key = jax.random.PRNGKey(0)
    kp, kx, kr, ke = jax.random.split(key, 4)

    N, E, FIN = 60, 250, 32        # non-multiples exercise the padding / masking paths
    x = jax.random.normal(kx, (N, FIN), dtype=jnp.float32)
    rev = jax.random.normal(kr, (E, FIN), dtype=jnp.float32)
    edge_index = jax.random.randint(ke, (2, E), 0, N, dtype=jnp.int32)

    params = init_gat_params(kp, 2, [4, 1], [FIN, 8, 8])

    out_nodes, out_rev, out_ei = gat_forward(params, (x, rev, edge_index))
    out_nodes = jax.block_until_ready(out_nodes)
    assert out_nodes.shape == (N, 8)
    assert bool(jnp.all(jnp.isfinite(out_nodes)))
    print("KERNEL_OK")
</pallas_src>

<mosaic_0001>
module attributes {stable_mosaic.version = 11 : i64} {
  func.func @_matmul_kernel(%arg0: i32, %arg1: memref<64x32xbf16, #tpu.memory_space<vmem>>, %arg2: memref<32x128xbf16, #tpu.memory_space<vmem>>, %arg3: memref<64x128xf32, #tpu.memory_space<vmem>>) attributes {dimension_semantics = [#tpu.dimension_semantics<parallel>], iteration_bounds = array<i64: 1>, scalar_prefetch = 0 : i64, scratch_operands = 0 : i64, tpu.core_type = #tpu.core_type<tc>, window_params = [{transform_indices = @transform_0, window_bounds = array<i64: 64, 32>}, {pipeline_mode = #tpu.pipeline_mode<synchronous>, transform_indices = @transform_1, window_bounds = array<i64: 32, 128>}, {transform_indices = @transform_2, window_bounds = array<i64: 64, 128>}]} {
    %c0 = arith.constant 0 : index
    %c0_0 = arith.constant 0 : index
    %0 = vector.load %arg1[%c0, %c0_0] : memref<64x32xbf16, #tpu.memory_space<vmem>>, vector<64x32xbf16>
    %c0_1 = arith.constant 0 : index
    %c0_2 = arith.constant 0 : index
    %1 = vector.load %arg2[%c0_1, %c0_2] : memref<32x128xbf16, #tpu.memory_space<vmem>>, vector<32x128xbf16>
    %cst = arith.constant dense<0.000000e+00> : vector<64x128xf32>
    %2 = tpu.matmul %0, %1, %cst {dimension_numbers = #tpu.dot_dimension_numbers<[1], [0], [0], [1], [0, 0, 1, 1], [], []>} : vector<64x32xbf16>, vector<32x128xbf16>, vector<64x128xf32> -> vector<64x128xf32>
    %c0_3 = arith.constant 0 : index
    %c0_4 = arith.constant 0 : index
    %3 = vector.load %arg3[%c0_3, %c0_4] : memref<64x128xf32, #tpu.memory_space<vmem>>, vector<64x128xf32>
    tpu.vector_store %arg3[%c0_3, %c0_4], %2 {strides = array<i32>} : memref<64x128xf32, #tpu.memory_space<vmem>>, vector<64x128xf32>,
    return
  }
  func.func @transform_0(%arg0: i32) -> (i32, i32) {
    %c0_i32 = arith.constant 0 : i32
    %c0_i32_0 = arith.constant 0 : i32
    return %arg0, %c0_i32 : i32, i32
  }
  func.func @transform_1(%arg0: i32) -> (i32, i32) {
    %c0_i32 = arith.constant 0 : i32
    %c0_i32_0 = arith.constant 0 : i32
    %c0_i32_1 = arith.constant 0 : i32
    return %c0_i32, %c0_i32_0 : i32, i32
  }
  func.func @transform_2(%arg0: i32) -> (i32, i32) {
    %c0_i32 = arith.constant 0 : i32
    %c0_i32_0 = arith.constant 0 : i32
    return %arg0, %c0_i32 : i32, i32
  }
}

</mosaic_0001>

<llo_original>
// kernel: tpu_custom_call.1
$region0: #{tpu_custom_call.1}
  #allocation0 [shape = 'u32[]', space=smem, size = 0x4, offset = 0x4, fixed_abs, tag = 'smem constant byte address 0x4 - core index']
  #allocation1 [shape = 'u32[72,128]{1,0:T(1,128)}', space=vmem, size = 0x9000, scoped, tag = 'internal scratch']
  %s0 = inlined_call_operand.vmem [shape: bf16[64,32], index: 0, kind: input, shape index: {}]
  %s1 = inlined_call_operand.vmem [shape: bf16[32,128], index: 1, kind: input, shape index: {}]
  %s2 = inlined_call_operand.hbm [shape: f32[64,128], index: 2, kind: output, shape index: {}]
  %s3 = sld [smem:[#allocation0]]
  $region18: #{tpu_custom_call.1} parent=0
    _
  %s5 = ssub.s32 1, %s3
  %s6 = scalar_select 0, %s5, %s3
  $region1: #{tpu_custom_call.1} parent=0
    #allocation2 [shape = 'u8[32768]{0}', space=vmem, size = 0x8000, scoped, tag = 'output window, operand 0, single buffered']
    #allocation3 [shape = 's32[1]{0}', space=sflag, size = 0x4, scoped, tag = 'scoped memory for tpu_custom_call.1']
    %7 = vsyncpa [#allocation3], 0
    // Predicated region
    $region2: #{tpu_custom_call.1} parent=1 // pred_check
      _
    $region3: #{tpu_custom_call.1} parent=1 // pred_check_branch
      %9 = sbr.rel (0) target = $region5
    $region4: #{tpu_custom_call.1} parent=1 // pred_region
      _
    $region5: #{tpu_custom_call.1} parent=1 // pred_fallthru
      _
    // Predicated region
    $region6: #{tpu_custom_call.1} parent=1 // pred_check
      _
    $region7: #{tpu_custom_call.1} parent=1 // pred_check_branch
      %11 = sbr.rel (0) target = $region9
    $region8: #{tpu_custom_call.1} parent=1 // pred_region
      _
    $region9: #{tpu_custom_call.1} parent=1 // pred_fallthru
      _
    %v13 = vld [vmem:[%s0] sm:$0xf]
    %v14 = vld [vmem:[%s0 + $0x4] sm:$0xf]
    %v15 = vld [vmem:[%s0 + $0x8] sm:$0xf]
    %v16 = vld [vmem:[%s0 + $0xc] sm:$0xf]
    %v17 = vld [vmem:[%s0 + $0x10] sm:$0xf]
    %v18 = vld [vmem:[%s0 + $0x14] sm:$0xf]
    %v19 = vld [vmem:[%s0 + $0x18] sm:$0xf]
    %v20 = vld [vmem:[%s0 + $0x1c] sm:$0xf]
    %v21 = vld [vmem:[%s1] sm:$0xf]
    %v22 = vld [vmem:[%s1 + $0x4] sm:$0xf]
    %v23 = vld [vmem:[%s1 + $0x8] sm:$0xf]
    %v24 = vld [vmem:[%s1 + $0xc] sm:$0xf]
    %v33 = vunpack.c.l.b16 %v13
    %v34 = vunpack.c.l.b16 %v14
    %v35 = vunpack.c.l.b16 %v15
    %v36 = vunpack.c.l.b16 %v16
    %v37 = vunpack.c.l.b16 %v17
    %v38 = vunpack.c.l.b16 %v18
    %v39 = vunpack.c.l.b16 %v19
    %v40 = vunpack.c.l.b16 %v20
    %v41 = vpack.c.b16 %v34, %v33
    %v42 = vpack.c.b16 %v36, %v35
    %v43 = vpack.c.b16 %v38, %v37
    %v44 = vpack.c.b16 %v40, %v39
    %v49 = vunpack.c.l.b16 %v21
    %v50 = vunpack.c.l.b16 %v22
    %v51 = vunpack.c.l.b16 %v23
    %v52 = vunpack.c.l.b16 %v24
    %v53 = vpack.c.b16 %v50, %v49
    %v54 = vpack.c.b16 %v52, %v51
    %vm57 = vcmask 261120
    %v59 = vsel %vm57, %v41, 0
    %v62 = vsel %vm57, %v42, 0
    %v65 = vsel %vm57, %v43, 0
    %v68 = vsel %vm57, %v44, 0
    %70 = vmatpush.bf16.msra.mxu0 0
    %71 = vmatpush.bf16.msra.mxu0 0
    %72 = vmatpush.bf16.msra.mxu0 0
    %73 = vmatpush.bf16.msra.mxu0 0
    %74 = vmatpush.bf16.msra.mxu0 0
    %75 = vmatpush.bf16.msra.mxu0 0
    %76 = vmatpush.bf16.msra.mxu0 %v54
    %77 = vmatpush.bf16.msra.mxu0 %v53
    %78 = vmatmul.bf16.gmra.mxu0 %v59
    %v79 = vpop.f32.mrf.mxu0
    %v80 = vadd.f32 0.0, %v79
    %v81 = vpop.f32.mrf.mxu0
    %v82 = vadd.f32 0.0, %v81
    %83 = vmatmul.bf16.gmra.mxu0 %v62
    %v84 = vpop.f32.mrf.mxu0
    %v85 = vadd.f32 0.0, %v84
    %v86 = vpop.f32.mrf.mxu0
    %v87 = vadd.f32 0.0, %v86
    %88 = vmatmul.bf16.gmra.mxu0 %v65
    %v89 = vpop.f32.mrf.mxu0
    %v90 = vadd.f32 0.0, %v89
    %v91 = vpop.f32.mrf.mxu0
    %v92 = vadd.f32 0.0, %v91
    %93 = vmatmul.bf16.gmra.mxu0 %v68
    %v94 = vpop.f32.mrf.mxu0
    %v95 = vadd.f32 0.0, %v94
    %v96 = vpop.f32.mrf.mxu0
    %v97 = vadd.f32 0.0, %v96
    %98 = vdwg.mxu0
    %99 = vst [vmem:[#allocation2] sm:$0xff] %v80
    %100 = vst [vmem:[#allocation2 + $0x8] sm:$0xff] %v82
    %101 = vst [vmem:[#allocation2 + $0x10] sm:$0xff] %v85
    %102 = vst [vmem:[#allocation2 + $0x18] sm:$0xff] %v87
    %103 = vst [vmem:[#allocation2 + $0x20] sm:$0xff] %v90
    %104 = vst [vmem:[#allocation2 + $0x28] sm:$0xff] %v92
    %105 = vst [vmem:[#allocation2 + $0x30] sm:$0xff] %v95
    %106 = vst [vmem:[#allocation2 + $0x38] sm:$0xff] %v97
    // Predicated region
    $region10: #{tpu_custom_call.1} parent=1 // pred_check
      _
    $region11: #{tpu_custom_call.1} parent=1 // pred_check_branch
      %108 = sbr.rel (0) target = $region13
    $region12: #{tpu_custom_call.1} parent=1 // pred_region
      %110 = vsyncadd [#allocation3], 0
      %s111 = sshll.u32 [#allocation2], 4
      %s112 = int_to_ptr.vmem [resolvable:$true] %s111
      %s113 = sshll.u32 %s2, 4
      %s114 = int_to_ptr.hbm [resolvable:$true] %s113
      %119 = dma.vmem_to_hbm [thread:$0]  %s112, 1024, %s114, [#allocation3], 128, 128, 8
    $region13: #{tpu_custom_call.1} parent=1 // pred_fallthru
      _
    // Predicated region
    $region14: #{tpu_custom_call.1} parent=1 // pred_check
      _
    $region15: #{tpu_custom_call.1} parent=1 // pred_check_branch
      %121 = sbr.rel (0) target = $region17
    $region16: #{tpu_custom_call.1} parent=1 // pred_region
      %123 = dma.done [#allocation3], 1024
    $region17: #{tpu_custom_call.1} parent=1 // pred_fallthru
      _
    %124 = vsyncpa [#allocation3], 1

</llo_original>
